<compile_context>
chip_gen: v7x
topology: tpu7x:2x2x1
jax: 0.10.0
libtpu: 0.0.40
codegen_flags: <defaults>
</compile_context>

<pallas_src>
import jax
import jax.numpy as jnp
from jax.experimental import pallas as pl
from jax.experimental.pallas import tpu as pltpu


# ---------------------------------------------------------------------------
# Zero-copy identity: output buffer aliases the input buffer.
# ---------------------------------------------------------------------------
def _identity_alias_kernel(x_hbm_ref, o_hbm_ref):
    # Output aliases input (input_output_aliases={0: 0}); the data is already in
    # place, so there is nothing to load, compute, or store.
    del x_hbm_ref, o_hbm_ref


def _identity_alias(x):
    return pl.pallas_call(
        _identity_alias_kernel,
        out_shape=jax.ShapeDtypeStruct(x.shape, x.dtype),
        in_specs=[pl.BlockSpec(memory_space=pl.ANY)],
        out_specs=pl.BlockSpec(memory_space=pl.ANY),
        input_output_aliases={0: 0},
    )(x)


# ---------------------------------------------------------------------------
# Optimized tiled-copy identity (used when aliasing is not applicable).
# ---------------------------------------------------------------------------
def _copy_kernel(x_ref, o_ref):
    o_ref[...] = x_ref[...]


# 2 MiB per block; 2 operands x 2 pipeline buffers = 8 MiB resident, which fits
# the default scoped VMEM on v5e (16 MiB), v6e (32 MiB) and v7x (32 MiB of 64 MiB).
_TARGET_BLOCK_BYTES = 2 * 1024 * 1024


def _factor_lane_dense(total):
    """Pick (rows, cols) with cols a wide multiple of 128 lanes."""
    for cols in (8192, 4096, 2048, 1024, 512, 256, 128):
        if total % cols == 0:
            return total // cols, cols
    cols = 512  # awkward size: pad up to a 512-lane-dense slab
    return (total + cols - 1) // cols, cols


def _identity_copy(x):
    orig_shape, dtype = x.shape, x.dtype
    total = x.size
    if total == 0:
        return x
    itemsize = jnp.dtype(dtype).itemsize

    rows, cols = _factor_lane_dense(total)
    padded = rows * cols
    flat = x.reshape(-1)
    if padded != total:
        flat = jnp.pad(flat, (0, padded - total))
    x2d = flat.reshape(rows, cols)

    # Sublane-packing-aware row tiling: 8 (f32), 16 (bf16/f16), 32 (int8/fp8).
    sub_mult = 8 * max(1, 4 // itemsize)
    tile_rows = max(
        sub_mult,
        (_TARGET_BLOCK_BYTES // (cols * itemsize)) // sub_mult * sub_mult,
    )
    if tile_rows >= rows:
        tile_rows = rows  # single full-extent block (always a legal block shape)
    num_blocks = (rows + tile_rows - 1) // tile_rows  # cdiv grid; partial tail masked

    out2d = pl.pallas_call(
        _copy_kernel,
        out_shape=jax.ShapeDtypeStruct((rows, cols), dtype),
        grid=(num_blocks,),
        in_specs=[pl.BlockSpec((tile_rows, cols), lambda i: (i, 0))],
        out_specs=pl.BlockSpec((tile_rows, cols), lambda i: (i, 0)),
        compiler_params=pltpu.CompilerParams(dimension_semantics=("parallel",)),
        cost_estimate=pl.CostEstimate(
            flops=0, transcendentals=0, bytes_accessed=2 * padded * itemsize
        ),
    )(x2d)

    out_flat = out2d.reshape(-1)
    if padded != total:
        out_flat = out_flat[:total]
    return out_flat.reshape(orig_shape)


def layer_id_forward(x):
    """Forward pass of LayerId: returns x unchanged (same shape, same dtype)."""
    if x.size == 0:
        return x
    try:
        return _identity_alias(x)  # zero HBM traffic (output aliases input)
    except Exception:
        # Safety net: optimized tiled VMEM copy if aliasing cannot be lowered.
        return _identity_copy(x)


if __name__ == "__main__":
    key = jax.random.PRNGKey(0)
    k1, k2 = jax.random.split(key)

    # NCHW conv-style feature map, consistent with the PyTorch module's use.
    x = jax.random.normal(k1, (2, 4, 16, 16), dtype=jnp.float32)
    y = jax.block_until_ready(layer_id_forward(x))
    assert y.shape == x.shape, (y.shape, x.shape)
    assert y.dtype == x.dtype, (y.dtype, x.dtype)
    assert bool(jnp.all(y == x)), "identity mismatch (aliased path)"

    # Awkward (non-multiple-of-128) shape exercises the tiled-copy path with
    # lane padding + masked tail handling.
    x2 = jax.random.normal(k2, (3, 5, 7), dtype=jnp.float32)
    y2 = jax.block_until_ready(_identity_copy(x2))
    assert y2.shape == x2.shape and y2.dtype == x2.dtype
    assert bool(jnp.all(y2 == x2)), "identity mismatch (copy path)"

    print("KERNEL_OK")
</pallas_src>

<mosaic_0001>
module attributes {stable_mosaic.version = 11 : i64} {
  func.func @_identity_alias_kernel(%arg0: memref<2x4x16x16xf32, #tpu.memory_space<any>>, %arg1: memref<2x4x16x16xf32, #tpu.memory_space<any>>) attributes {dimension_semantics = [], scalar_prefetch = 0 : i64, scratch_operands = 0 : i64, tpu.core_type = #tpu.core_type<tc>} {
    return
  }
}

module attributes {stable_mosaic.version = 11 : i64} {
  func.func @_copy_kernel(%arg0: i32, %arg1: memref<1x2048xf32, #tpu.memory_space<vmem>>, %arg2: memref<1x2048xf32, #tpu.memory_space<vmem>>) attributes {dimension_semantics = [#tpu.dimension_semantics<parallel>], iteration_bounds = array<i64: 1>, scalar_prefetch = 0 : i64, scratch_operands = 0 : i64, tpu.core_type = #tpu.core_type<tc>, window_params = [{transform_indices = @transform_0, window_bounds = array<i64: 1, 2048>}, {transform_indices = @transform_1, window_bounds = array<i64: 1, 2048>}]} {
    %c0 = arith.constant 0 : index
    %c0_0 = arith.constant 0 : index
    %0 = vector.load %arg1[%c0, %c0_0] : memref<1x2048xf32, #tpu.memory_space<vmem>>, vector<1x2048xf32>
    %c0_1 = arith.constant 0 : index
    %c0_2 = arith.constant 0 : index
    %1 = vector.load %arg2[%c0_1, %c0_2] : memref<1x2048xf32, #tpu.memory_space<vmem>>, vector<1x2048xf32>
    tpu.vector_store %arg2[%c0_1, %c0_2], %0 {strides = array<i32>} : memref<1x2048xf32, #tpu.memory_space<vmem>>, vector<1x2048xf32>,
    return
  }
  func.func @transform_0(%arg0: i32) -> (i32, i32) {
    %c0_i32 = arith.constant 0 : i32
    %c0_i32_0 = arith.constant 0 : i32
    return %arg0, %c0_i32 : i32, i32
  }
  func.func @transform_1(%arg0: i32) -> (i32, i32) {
    %c0_i32 = arith.constant 0 : i32
    %c0_i32_0 = arith.constant 0 : i32
    return %arg0, %c0_i32 : i32, i32
  }
}

</mosaic_0001>

<llo_original>
// kernel: tpu_custom_call.1
$region0: #{tpu_custom_call.1}
  #allocation0 [shape = 'u32[]', space=smem, size = 0x4, offset = 0x4, fixed_abs, tag = 'smem constant byte address 0x4 - core index']
  #allocation1 [shape = 'u32[144,128]{1,0:T(1,128)}', space=vmem, size = 0x12000, scoped, tag = 'internal scratch']
  %s0 = inlined_call_operand.hbm [shape: f32[2,4,16,16], index: 0, kind: input, shape index: {}, may-alias: {0,1}]
  %s1 = inlined_call_operand.hbm [shape: f32[2,4,16,16], index: 1, kind: output, shape index: {}, may-alias: {0,1}]
  %s2 = sld [smem:[#allocation0]]
  $region2: #{tpu_custom_call.1} parent=0
    _
  %s4 = ssub.s32 1, %s2
  %s5 = scalar_select 0, %s4, %s2

// kernel: tpu_custom_call.1
$region0: #{tpu_custom_call.1}
  #allocation0 [shape = 'u32[]', space=smem, size = 0x4, offset = 0x4, fixed_abs, tag = 'smem constant byte address 0x4 - core index']
  #allocation1 [shape = 'u32[144,128]{1,0:T(1,128)}', space=vmem, size = 0x12000, scoped, tag = 'internal scratch']
  %s0 = inlined_call_operand.hbm [shape: f32[1,2048], index: 0, kind: input, shape index: {}]
  %s1 = inlined_call_operand.hbm [shape: f32[1,2048], index: 1, kind: output, shape index: {}]
  %s2 = sld [smem:[#allocation0]]
  $region18: #{tpu_custom_call.1} parent=0
    _
  %s4 = ssub.s32 1, %s2
  %s5 = scalar_select 0, %s4, %s2
  $region1: #{tpu_custom_call.1} parent=0
    #allocation2 [shape = 'u8[8192]{0}', space=vmem, size = 0x2000, scoped, tag = 'input window, operand 0, single buffered']
    #allocation3 [shape = 's32[1]{0}', space=sflag, size = 0x4, scoped, tag = 'scoped memory for tpu_custom_call.1']
    #allocation4 [shape = 's32[1]{0}', space=sflag, size = 0x4, scoped, tag = 'scoped memory for tpu_custom_call.1']
    #allocation5 [shape = 'u8[8192]{0}', space=vmem, size = 0x2000, scoped, tag = 'output window, operand 0, single buffered']
    %6 = vsyncpa [#allocation3], 0
    %7 = vsyncpa [#allocation4], 0
    // Predicated region
    $region2: #{tpu_custom_call.1} parent=1 // pred_check
      _
    $region3: #{tpu_custom_call.1} parent=1 // pred_check_branch
      %9 = sbr.rel (0) target = $region5
    $region4: #{tpu_custom_call.1} parent=1 // pred_region
      %s11 = ssub.s32 256, 256
      %12 = vsyncadd [#allocation3], %s11
      %s14 = sshll.u32 [#allocation2], 4
      %s15 = int_to_ptr.vmem [resolvable:$true] %s14
      %17 = dma.hbm_to_vmem [thread:$0]  %s0, 256, %s15, [#allocation3]
    $region5: #{tpu_custom_call.1} parent=1 // pred_fallthru
      _
    // Predicated region
    $region6: #{tpu_custom_call.1} parent=1 // pred_check
      _
    $region7: #{tpu_custom_call.1} parent=1 // pred_check_branch
      %19 = sbr.rel (0) target = $region9
    $region8: #{tpu_custom_call.1} parent=1 // pred_region
      %20 = dma.done [#allocation3], 256
    $region9: #{tpu_custom_call.1} parent=1 // pred_fallthru
      _
    %v21 = vld [vmem:[#allocation2] sm:$0xff]
    %v22 = vld [vmem:[#allocation2 + $0x8] sm:$0xff]
    %23 = vst [vmem:[#allocation5] sm:$0xff] %v21
    %24 = vst [vmem:[#allocation5 + $0x8] sm:$0xff] %v22
    // Predicated region
    $region10: #{tpu_custom_call.1} parent=1 // pred_check
      _
    $region11: #{tpu_custom_call.1} parent=1 // pred_check_branch
      %26 = sbr.rel (0) target = $region13
    $region12: #{tpu_custom_call.1} parent=1 // pred_region
      %s28 = ssub.s32 256, 256
      %29 = vsyncadd [#allocation4], %s28
      %s31 = sshll.u32 [#allocation5], 4
      %s32 = int_to_ptr.vmem [resolvable:$true] %s31
      %34 = dma.vmem_to_hbm [thread:$0]  %s32, 256, %s1, [#allocation4]
    $region13: #{tpu_custom_call.1} parent=1 // pred_fallthru
      _
    // Predicated region
    $region14: #{tpu_custom_call.1} parent=1 // pred_check
      _
    $region15: #{tpu_custom_call.1} parent=1 // pred_check_branch
      %36 = sbr.rel (0) target = $region17
    $region16: #{tpu_custom_call.1} parent=1 // pred_region
      %37 = dma.done [#allocation4], 256
    $region17: #{tpu_custom_call.1} parent=1 // pred_fallthru
      _
    %38 = vsyncpa [#allocation3], 1
    %39 = vsyncpa [#allocation4], 1

</llo_original>
